<compile_context>
chip_gen: v7x
topology: tpu7x:2x2x1
jax: 0.10.0
libtpu: 0.0.40
codegen_flags: <defaults>
</compile_context>

<pallas_src>
import jax
import jax.numpy as jnp
from jax.experimental import pallas as pl
from jax.experimental.pallas import tpu as pltpu

IN_FEATURES = 4
HIDDEN = 64
LANE = 128


def critic_kernel(xT_ref, w1_ref, b1_ref, w2_ref, b2_ref, o_ref):
    """One batch tile, lane-dense layout (batch on lanes).

    xT_ref : (4, TB)   input tile, batch on lanes
    w1_ref : (64, 4)   layer-1 weight, PyTorch (out, in) layout -> W1 @ xT == (x @ W1.T).T
    b1_ref : (64, 1)   layer-1 bias (broadcast over lanes)
    w2_ref : (64, 1)   layer-2 weight as a column
    b2_ref : (1, 1)    layer-2 bias, SMEM scalar
    o_ref  : (1, TB)   value estimates, batch on lanes
    """
    # Hidden layer: (64,4) @ (4,TB) -> (64,TB); bias + ReLU on the VPU.
    h = jnp.dot(w1_ref[...], xT_ref[...], preferred_element_type=jnp.float32)
    h = jnp.maximum(h + b1_ref[...], 0.0)
    # Output layer: VPU multiply + cross-sublane (XLU) reduce instead of an N=1 MXU matmul.
    v = jnp.sum(h * w2_ref[...], axis=0, keepdims=True)          # (1, TB)
    o_ref[...] = (v + b2_ref[0, 0]).astype(o_ref.dtype)


def critic_forward(x, w1, b1, w2, b2, *, tb=1024):
    """x: (B, 4) float32 -> (B, 1) float32 (matches PyTorch CriticNet.forward)."""
    B = x.shape[0]

    # Lane-dense batch tiling: tile must be a multiple of 128 lanes; cap at `tb`.
    tb_eff = min(tb, max(LANE, pl.cdiv(B, LANE) * LANE))
    b_pad = pl.cdiv(B, tb_eff) * tb_eff
    grid = (b_pad // tb_eff,)

    # Wrapper-side layout plumbing: pad batch, put batch on the last (lane) dim.
    x_pad = jnp.pad(x, ((0, b_pad - B), (0, 0)))
    xT = x_pad.T                                   # (4, b_pad)
    b1c = b1.reshape(HIDDEN, 1).astype(jnp.float32)
    w2c = w2.reshape(HIDDEN, 1).astype(jnp.float32)
    b2s = b2.reshape(1, 1).astype(jnp.float32)

    flops = 2 * b_pad * (IN_FEATURES * HIDDEN + HIDDEN)
    bytes_accessed = 4 * (xT.size + b_pad + w1.size + b1c.size + w2c.size + b2s.size)

    out_T = pl.pallas_call(
        critic_kernel,
        out_shape=jax.ShapeDtypeStruct((1, b_pad), jnp.float32),
        grid=grid,
        in_specs=[
            pl.BlockSpec((IN_FEATURES, tb_eff), lambda i: (0, i)),  # xT: tiled over batch
            pl.BlockSpec((HIDDEN, IN_FEATURES), lambda i: (0, 0)),  # w1: resident in VMEM
            pl.BlockSpec((HIDDEN, 1), lambda i: (0, 0)),            # b1: resident
            pl.BlockSpec((HIDDEN, 1), lambda i: (0, 0)),            # w2: resident
            pl.BlockSpec(memory_space=pltpu.SMEM),                  # b2: scalar in SMEM
        ],
        out_specs=pl.BlockSpec((1, tb_eff), lambda i: (0, i)),
        compiler_params=pltpu.CompilerParams(
            dimension_semantics=("parallel",)),
        cost_estimate=pl.CostEstimate(
            flops=flops, transcendentals=0, bytes_accessed=bytes_accessed),
    )(xT, w1.astype(jnp.float32), b1c, w2c, b2s)

    # Un-pad and restore the PyTorch output shape (B, 1).
    return out_T[0, :B].reshape(B, 1)


def init_params(key):
    """Deterministic init matching PyTorch nn.Linear default: U(-1/sqrt(fan_in), +1/sqrt(fan_in)).

    Weights are kept in PyTorch (out_features, in_features) layout.
    """
    k1, k2, k3, k4 = jax.random.split(key, 4)
    bound1 = 1.0 / jnp.sqrt(float(IN_FEATURES))
    bound2 = 1.0 / jnp.sqrt(float(HIDDEN))
    w1 = jax.random.uniform(k1, (HIDDEN, IN_FEATURES), jnp.float32, -bound1, bound1)
    b1 = jax.random.uniform(k2, (HIDDEN,), jnp.float32, -bound1, bound1)
    w2 = jax.random.uniform(k3, (1, HIDDEN), jnp.float32, -bound2, bound2)
    b2 = jax.random.uniform(k4, (1,), jnp.float32, -bound2, bound2)
    return w1, b1, w2, b2


def reference_forward(x, w1, b1, w2, b2):
    h = jnp.maximum(x @ w1.T + b1, 0.0)
    return h @ w2.T + b2


if __name__ == "__main__":
    key = jax.random.PRNGKey(0)
    kx, kp = jax.random.split(key)

    batch = 8
    x = jax.random.normal(kx, (batch, IN_FEATURES), jnp.float32)  # state vectors of dim 4
    w1, b1, w2, b2 = init_params(kp)

    out = critic_forward(x, w1, b1, w2, b2)
    out = jax.block_until_ready(out)

    ref = reference_forward(x, w1, b1, w2, b2)
    assert out.shape == (batch, 1)
    assert jnp.allclose(out, ref, atol=1e-4, rtol=1e-4)

    print("KERNEL_OK")
</pallas_src>

<mosaic_0001>
module attributes {stable_mosaic.version = 11 : i64} {
  func.func @critic_kernel(%arg0: i32, %arg1: memref<4x128xf32, #tpu.memory_space<vmem>>, %arg2: memref<64x4xf32, #tpu.memory_space<vmem>>, %arg3: memref<64x1xf32, #tpu.memory_space<vmem>>, %arg4: memref<64x1xf32, #tpu.memory_space<vmem>>, %arg5: memref<1x1xf32, #tpu.memory_space<smem>>, %arg6: memref<1x128xf32, #tpu.memory_space<vmem>>) attributes {dimension_semantics = [#tpu.dimension_semantics<parallel>], iteration_bounds = array<i64: 1>, scalar_prefetch = 0 : i64, scratch_operands = 0 : i64, tpu.core_type = #tpu.core_type<tc>, window_params = [{transform_indices = @transform_0, window_bounds = array<i64: 4, 128>}, {pipeline_mode = #tpu.pipeline_mode<synchronous>, transform_indices = @transform_1, window_bounds = array<i64: 64, 4>}, {pipeline_mode = #tpu.pipeline_mode<synchronous>, transform_indices = @transform_2, window_bounds = array<i64: 64, 1>}, {pipeline_mode = #tpu.pipeline_mode<synchronous>, transform_indices = @transform_3, window_bounds = array<i64: 64, 1>}, {transform_indices = @transform_4, window_bounds = array<i64: 1, 1>}, {transform_indices = @transform_5, window_bounds = array<i64: 1, 128>}]} {
    %c0 = arith.constant 0 : index
    %c0_0 = arith.constant 0 : index
    %0 = vector.load %arg2[%c0, %c0_0] : memref<64x4xf32, #tpu.memory_space<vmem>>, vector<64x4xf32>
    %c0_1 = arith.constant 0 : index
    %c0_2 = arith.constant 0 : index
    %1 = vector.load %arg1[%c0_1, %c0_2] : memref<4x128xf32, #tpu.memory_space<vmem>>, vector<4x128xf32>
    %cst = arith.constant dense<0.000000e+00> : vector<64x128xf32>
    %2 = tpu.matmul %0, %1, %cst {dimension_numbers = #tpu.dot_dimension_numbers<[1], [0], [0], [1], [0, 0, 1, 1], [], []>} : vector<64x4xf32>, vector<4x128xf32>, vector<64x128xf32> -> vector<64x128xf32>
    %c0_3 = arith.constant 0 : index
    %c0_4 = arith.constant 0 : index
    %3 = vector.load %arg3[%c0_3, %c0_4] : memref<64x1xf32, #tpu.memory_space<vmem>>, vector<64x1xf32>
    %4 = vector.broadcast %3 : vector<64x1xf32> to vector<64x128xf32>
    %5 = arith.addf %2, %4 : vector<64x128xf32>
    %cst_5 = arith.constant 0.000000e+00 : f32
    %6 = vector.broadcast %cst_5 : f32 to vector<64x128xf32>
    %7 = arith.maximumf %5, %6 : vector<64x128xf32>
    %c0_6 = arith.constant 0 : index
    %c0_7 = arith.constant 0 : index
    %8 = vector.load %arg4[%c0_6, %c0_7] : memref<64x1xf32, #tpu.memory_space<vmem>>, vector<64x1xf32>
    %9 = vector.broadcast %8 : vector<64x1xf32> to vector<64x128xf32>
    %10 = arith.mulf %7, %9 : vector<64x128xf32>
    %cst_8 = arith.constant dense<0.000000e+00> : vector<128xf32>
    %11 = vector.multi_reduction <add>, %10, %cst_8 [0] : vector<64x128xf32> to vector<128xf32>
    %12 = vector.shape_cast %11 : vector<128xf32> to vector<1x128xf32>
    %c0_9 = arith.constant 0 : index
    %c0_10 = arith.constant 0 : index
    %13 = memref.load %arg5[%c0_9, %c0_10] : memref<1x1xf32, #tpu.memory_space<smem>>
    %14 = vector.broadcast %13 : f32 to vector<1x128xf32>
    %15 = arith.addf %12, %14 : vector<1x128xf32>
    %c0_11 = arith.constant 0 : index
    %c0_12 = arith.constant 0 : index
    %16 = vector.load %arg6[%c0_11, %c0_12] : memref<1x128xf32, #tpu.memory_space<vmem>>, vector<1x128xf32>
    tpu.vector_store %arg6[%c0_11, %c0_12], %15 {strides = array<i32>} : memref<1x128xf32, #tpu.memory_space<vmem>>, vector<1x128xf32>,
    return
  }
  func.func @transform_0(%arg0: i32) -> (i32, i32) {
    %c0_i32 = arith.constant 0 : i32
    %c0_i32_0 = arith.constant 0 : i32
    return %c0_i32, %arg0 : i32, i32
  }
  func.func @transform_1(%arg0: i32) -> (i32, i32) {
    %c0_i32 = arith.constant 0 : i32
    %c0_i32_0 = arith.constant 0 : i32
    %c0_i32_1 = arith.constant 0 : i32
    return %c0_i32, %c0_i32_0 : i32, i32
  }
  func.func @transform_2(%arg0: i32) -> (i32, i32) {
    %c0_i32 = arith.constant 0 : i32
    %c0_i32_0 = arith.constant 0 : i32
    %c0_i32_1 = arith.constant 0 : i32
    return %c0_i32, %c0_i32_0 : i32, i32
  }
  func.func @transform_3(%arg0: i32) -> (i32, i32) {
    %c0_i32 = arith.constant 0 : i32
    %c0_i32_0 = arith.constant 0 : i32
    %c0_i32_1 = arith.constant 0 : i32
    return %c0_i32, %c0_i32_0 : i32, i32
  }
  func.func @transform_4(%arg0: i32) -> (i32, i32) {
    %c0_i32 = arith.constant 0 : i32
    %c0_i32_0 = arith.constant 0 : i32
    %c0_i32_1 = arith.constant 0 : i32
    return %c0_i32, %c0_i32_0 : i32, i32
  }
  func.func @transform_5(%arg0: i32) -> (i32, i32) {
    %c0_i32 = arith.constant 0 : i32
    %c0_i32_0 = arith.constant 0 : i32
    return %c0_i32, %arg0 : i32, i32
  }
}

</mosaic_0001>

<llo_original>
// kernel: tpu_custom_call.1
$region0: #{tpu_custom_call.1}
  #allocation0 [shape = 'u32[]', space=smem, size = 0x4, offset = 0x4, fixed_abs, tag = 'smem constant byte address 0x4 - core index']
  #allocation1 [shape = 'u32[144,128]{1,0:T(1,128)}', space=vmem, size = 0x12000, scoped, tag = 'internal scratch']
  #allocation2 [shape = 'f32[1,1]{1,0:T(1,128)S(6)}', space=smem, size = 0x200, scoped, tag = 'scoped memory for tpu_custom_call.1']
  %s0 = inlined_call_operand.vmem [shape: f32[4,128], index: 0, kind: input, shape index: {}]
  %s1 = inlined_call_operand.vmem [shape: f32[64,4], index: 1, kind: input, shape index: {}]
  %s2 = inlined_call_operand.vmem [shape: f32[64,1], index: 2, kind: input, shape index: {}]
  %s3 = inlined_call_operand.vmem [shape: f32[64,1], index: 3, kind: input, shape index: {}]
  %s4 = inlined_call_operand.<no memory space> [shape: f32[1,1], index: 4, kind: input, shape index: {}]
  %s5 = inlined_call_operand.hbm [shape: f32[1,128], index: 5, kind: output, shape index: {}]
  %s6 = sld [smem:[#allocation0]]
  $region30: #{tpu_custom_call.1} parent=0
    _
  %s8 = ssub.s32 1, %s6
  %s9 = scalar_select 0, %s8, %s6
  %10 = sst [smem:[#allocation2]] %s4
  $region1: #{tpu_custom_call.1} parent=0
    #allocation3 [shape = 'u8[512]{0}', space=vmem, size = 0x400, scoped, tag = 'output window, operand 0, single buffered']
    #allocation4 [shape = 's32[1]{0}', space=sflag, size = 0x4, scoped, tag = 'scoped memory for tpu_custom_call.1']
    %11 = vsyncpa [#allocation4], 0
    // Predicated region
    $region2: #{tpu_custom_call.1} parent=1 // pred_check
      _
    $region3: #{tpu_custom_call.1} parent=1 // pred_check_branch
      %13 = sbr.rel (0) target = $region5
    $region4: #{tpu_custom_call.1} parent=1 // pred_region
      _
    $region5: #{tpu_custom_call.1} parent=1 // pred_fallthru
      _
    // Predicated region
    $region6: #{tpu_custom_call.1} parent=1 // pred_check
      _
    $region7: #{tpu_custom_call.1} parent=1 // pred_check_branch
      %15 = sbr.rel (0) target = $region9
    $region8: #{tpu_custom_call.1} parent=1 // pred_region
      _
    $region9: #{tpu_custom_call.1} parent=1 // pred_fallthru
      _
    // Predicated region
    $region10: #{tpu_custom_call.1} parent=1 // pred_check
      _
    $region11: #{tpu_custom_call.1} parent=1 // pred_check_branch
      %17 = sbr.rel (0) target = $region13
    $region12: #{tpu_custom_call.1} parent=1 // pred_region
      _
    $region13: #{tpu_custom_call.1} parent=1 // pred_fallthru
      _
    // Predicated region
    $region14: #{tpu_custom_call.1} parent=1 // pred_check
      _
    $region15: #{tpu_custom_call.1} parent=1 // pred_check_branch
      %19 = sbr.rel (0) target = $region17
    $region16: #{tpu_custom_call.1} parent=1 // pred_region
      _
    $region17: #{tpu_custom_call.1} parent=1 // pred_fallthru
      _
    // Predicated region
    $region18: #{tpu_custom_call.1} parent=1 // pred_check
      _
    $region19: #{tpu_custom_call.1} parent=1 // pred_check_branch
      %21 = sbr.rel (0) target = $region21
    $region20: #{tpu_custom_call.1} parent=1 // pred_region
      _
    $region21: #{tpu_custom_call.1} parent=1 // pred_fallthru
      _
    %v22 = vld [vmem:[%s1] sm:$0xff]
    %v23 = vld [vmem:[%s1 + $0x8] sm:$0xff]
    %v24 = vld [vmem:[%s1 + $0x10] sm:$0xff]
    %v25 = vld [vmem:[%s1 + $0x18] sm:$0xff]
    %v26 = vld [vmem:[%s1 + $0x20] sm:$0xff]
    %v27 = vld [vmem:[%s1 + $0x28] sm:$0xff]
    %v28 = vld [vmem:[%s1 + $0x30] sm:$0xff]
    %v29 = vld [vmem:[%s1 + $0x38] sm:$0xff]
    %v30 = vld [vmem:[%s0] sm:$0xf]
    %v31 = vld [vmem:[%s2] sm:$0xff]
    %v32 = vld [vmem:[%s2 + $0x8] sm:$0xff]
    %v33 = vld [vmem:[%s2 + $0x10] sm:$0xff]
    %v34 = vld [vmem:[%s2 + $0x18] sm:$0xff]
    %v35 = vld [vmem:[%s2 + $0x20] sm:$0xff]
    %v36 = vld [vmem:[%s2 + $0x28] sm:$0xff]
    %v37 = vld [vmem:[%s2 + $0x30] sm:$0xff]
    %v38 = vld [vmem:[%s2 + $0x38] sm:$0xff]
    %40 = vset.pattern.permute.xlu0 0
    %41 = vperm.xlu0 %40, %v31
    %v42 = vpop.permute.xlu0 %41
    %45 = vset.pattern.permute.xlu0 0
    %46 = vperm.xlu0 %45, %v32
    %v47 = vpop.permute.xlu0 %46
    %50 = vset.pattern.permute.xlu0 0
    %51 = vperm.xlu0 %50, %v33
    %v52 = vpop.permute.xlu0 %51
    %55 = vset.pattern.permute.xlu0 0
    %56 = vperm.xlu0 %55, %v34
    %v57 = vpop.permute.xlu0 %56
    %60 = vset.pattern.permute.xlu0 0
    %61 = vperm.xlu0 %60, %v35
    %v62 = vpop.permute.xlu0 %61
    %65 = vset.pattern.permute.xlu0 0
    %66 = vperm.xlu0 %65, %v36
    %v67 = vpop.permute.xlu0 %66
    %70 = vset.pattern.permute.xlu0 0
    %71 = vperm.xlu0 %70, %v37
    %v72 = vpop.permute.xlu0 %71
    %75 = vset.pattern.permute.xlu0 0
    %76 = vperm.xlu0 %75, %v38
    %v77 = vpop.permute.xlu0 %76
    %vm79 = vcmask 31744
    %v81 = vsel %vm79, %v22, 0
    %v84 = vsel %vm79, %v23, 0
    %v87 = vsel %vm79, %v24, 0
    %v90 = vsel %vm79, %v25, 0
    %v93 = vsel %vm79, %v26, 0
    %v96 = vsel %vm79, %v27, 0
    %v99 = vsel %vm79, %v28, 0
    %v102 = vsel %vm79, %v29, 0
    %vm104 = vcmask 1043456
    %v106 = vsel %vm104, %v30, 0
    %108 = vmatprep.subr.mxu0 0.0
    %109 = vmatpush1.msra.mxu0 %v106
    %110 = vmatprep.subr.mxu0 0.0
    %111 = vmatpush1.msra.mxu0 0.0
    %112 = vmatprep.subr.mxu0 0.0
    %113 = vmatpush1.msra.mxu0 0.0
    %114 = vmatprep.subr.mxu0 0.0
    %115 = vmatpush1.msra.mxu0 0.0
    %116 = vmatprep.subr.mxu0 0.0
    %117 = vmatpush1.msra.mxu0 0.0
    %118 = vmatprep.subr.mxu0 0.0
    %119 = vmatpush1.msra.mxu0 0.0
    %120 = vmatprep.subr.mxu0 0.0
    %121 = vmatpush1.msra.mxu0 0.0
    %122 = vmatprep.subr.mxu0 0.0
    %123 = vmatpush1.msra.mxu0 0.0
    %124 = vmatprep.subr.mxu0 0.0
    %125 = vmatpush1.msra.mxu0 0.0
    %126 = vmatprep.subr.mxu0 0.0
    %127 = vmatpush1.msra.mxu0 0.0
    %128 = vmatprep.subr.mxu0 0.0
    %129 = vmatpush1.msra.mxu0 0.0
    %130 = vmatprep.subr.mxu0 0.0
    %131 = vmatpush1.msra.mxu0 0.0
    %132 = vmatprep.subr.mxu0 0.0
    %133 = vmatpush1.msra.mxu0 0.0
    %134 = vmatprep.subr.mxu0 0.0
    %135 = vmatpush1.msra.mxu0 0.0
    %136 = vmatprep.subr.mxu0 0.0
    %137 = vmatpush1.msra.mxu0 0.0
    %138 = vmatprep.subr.mxu0 0.0
    %139 = vmatpush1.msra.mxu0 0.0
    %140 = vmatprep.subr.mxu0 0.0
    %141 = vmatpush1.msra.mxu0 0.0
    %142 = vmatprep.subr.mxu0 0.0
    %143 = vmatpush1.msra.mxu0 0.0
    %144 = vmatprep.subr.mxu0 0.0
    %145 = vmatpush1.msra.mxu0 0.0
    %146 = vmatprep.subr.mxu0 0.0
    %147 = vmatpush1.msra.mxu0 0.0
    %148 = vmatprep.subr.mxu0 0.0
    %149 = vmatpush1.msra.mxu0 0.0
    %150 = vmatprep.subr.mxu0 0.0
    %151 = vmatpush1.msra.mxu0 0.0
    %152 = vmatprep.subr.mxu0 0.0
    %153 = vmatpush1.msra.mxu0 0.0
    %154 = vmatprep.subr.mxu0 0.0
    %155 = vmatpush1.msra.mxu0 0.0
    %156 = vmatprep.subr.mxu0 0.0
    %157 = vmatpush1.msra.mxu0 0.0
    %158 = vmatprep.subr.mxu0 0.0
    %159 = vmatpush1.msra.mxu0 0.0
    %160 = vmatprep.subr.mxu0 0.0
    %161 = vmatpush1.msra.mxu0 0.0
    %162 = vmatprep.subr.mxu0 0.0
    %163 = vmatpush1.msra.mxu0 0.0
    %164 = vmatprep.subr.mxu0 0.0
    %165 = vmatpush1.msra.mxu0 0.0
    %166 = vmatprep.subr.mxu0 0.0
    %167 = vmatpush1.msra.mxu0 0.0
    %168 = vmatprep.subr.mxu0 0.0
    %169 = vmatpush1.msra.mxu0 0.0
    %170 = vmatprep.subr.mxu0 0.0
    %171 = vmatpush1.msra.mxu0 0.0
    %172 = vmatprep.mubr.f32.mxu0 0.0
    %173 = vmatmul.mubr.f32.gmra.mrb[0].mxu0 %v81
    %v174 = vpop.f32.mrb[0].mxu0
    %v175 = vadd.f32 %v42, %v174
    %v176 = vpop.f32.mrb[0].mxu0
    %177 = vmatprep.mubr.f32.mxu0 0.0
    %178 = vmatmul.mubr.f32.gmra.mrb[0].mxu0 %v84
    %v179 = vpop.f32.mrb[0].mxu0
    %v180 = vadd.f32 %v47, %v179
    %v181 = vpop.f32.mrb[0].mxu0
    %182 = vmatprep.mubr.f32.mxu0 0.0
    %183 = vmatmul.mubr.f32.gmra.mrb[0].mxu0 %v87
    %v184 = vpop.f32.mrb[0].mxu0
    %v185 = vadd.f32 %v52, %v184
    %v186 = vpop.f32.mrb[0].mxu0
    %187 = vmatprep.mubr.f32.mxu0 0.0
    %188 = vmatmul.mubr.f32.gmra.mrb[0].mxu0 %v90
    %v189 = vpop.f32.mrb[0].mxu0
    %v190 = vadd.f32 %v57, %v189
    %v191 = vpop.f32.mrb[0].mxu0
    %192 = vmatprep.mubr.f32.mxu0 0.0
    %193 = vmatmul.mubr.f32.gmra.mrb[0].mxu0 %v93
    %v194 = vpop.f32.mrb[0].mxu0
    %v195 = vadd.f32 %v62, %v194
    %v196 = vpop.f32.mrb[0].mxu0
    %197 = vmatprep.mubr.f32.mxu0 0.0
    %198 = vmatmul.mubr.f32.gmra.mrb[0].mxu0 %v96
    %v199 = vpop.f32.mrb[0].mxu0
    %v200 = vadd.f32 %v67, %v199
    %v201 = vpop.f32.mrb[0].mxu0
    %202 = vmatprep.mubr.f32.mxu0 0.0
    %203 = vmatmul.mubr.f32.gmra.mrb[0].mxu0 %v99
    %v204 = vpop.f32.mrb[0].mxu0
    %v205 = vadd.f32 %v72, %v204
    %v206 = vpop.f32.mrb[0].mxu0
    %207 = vmatprep.mubr.f32.mxu0 0.0
    %208 = vmatmul.mubr.f32.gmra.mrb[0].mxu0 %v102
    %v209 = vpop.f32.mrb[0].mxu0
    %v210 = vadd.f32 %v77, %v209
    %v211 = vpop.f32.mrb[0].mxu0
    %212 = vdwg.mxu0
    %v213 = vmax.f32 %v175, 0.0
    %v214 = vmax.f32 %v180, 0.0
    %v215 = vmax.f32 %v185, 0.0
    %v216 = vmax.f32 %v190, 0.0
    %v217 = vmax.f32 %v195, 0.0
    %v218 = vmax.f32 %v200, 0.0
    %v219 = vmax.f32 %v205, 0.0
    %v220 = vmax.f32 %v210, 0.0
    %v221 = vld [vmem:[%s3] sm:$0xff]
    %v222 = vld [vmem:[%s3 + $0x8] sm:$0xff]
    %v223 = vld [vmem:[%s3 + $0x10] sm:$0xff]
    %v224 = vld [vmem:[%s3 + $0x18] sm:$0xff]
    %v225 = vld [vmem:[%s3 + $0x20] sm:$0xff]
    %v226 = vld [vmem:[%s3 + $0x28] sm:$0xff]
    %v227 = vld [vmem:[%s3 + $0x30] sm:$0xff]
    %v228 = vld [vmem:[%s3 + $0x38] sm:$0xff]
    %230 = vset.pattern.permute.xlu0 0
    %231 = vperm.xlu0 %230, %v221
    %v232 = vpop.permute.xlu0 %231
    %235 = vset.pattern.permute.xlu0 0
    %236 = vperm.xlu0 %235, %v222
    %v237 = vpop.permute.xlu0 %236
    %240 = vset.pattern.permute.xlu0 0
    %241 = vperm.xlu0 %240, %v223
    %v242 = vpop.permute.xlu0 %241
    %245 = vset.pattern.permute.xlu0 0
    %246 = vperm.xlu0 %245, %v224
    %v247 = vpop.permute.xlu0 %246
    %250 = vset.pattern.permute.xlu0 0
    %251 = vperm.xlu0 %250, %v225
    %v252 = vpop.permute.xlu0 %251
    %255 = vset.pattern.permute.xlu0 0
    %256 = vperm.xlu0 %255, %v226
    %v257 = vpop.permute.xlu0 %256
    %260 = vset.pattern.permute.xlu0 0
    %261 = vperm.xlu0 %260, %v227
    %v262 = vpop.permute.xlu0 %261
    %265 = vset.pattern.permute.xlu0 0
    %266 = vperm.xlu0 %265, %v228
    %v267 = vpop.permute.xlu0 %266
    %v269 = vmul.f32 %v213, %v232
    %v270 = vmul.f32 %v214, %v237
    %v271 = vmul.f32 %v215, %v242
    %v272 = vmul.f32 %v216, %v247
    %v273 = vmul.f32 %v217, %v252
    %v274 = vmul.f32 %v218, %v257
    %v275 = vmul.f32 %v219, %v262
    %v276 = vmul.f32 %v220, %v267
    %v277 = vadd.f32 %v269, %v270
    %v278 = vadd.f32 %v277, %v271
    %v279 = vadd.f32 %v278, %v272
    %v280 = vadd.f32 %v279, %v273
    %v281 = vadd.f32 %v280, %v274
    %v282 = vadd.f32 %v281, %v275
    %v283 = vadd.f32 %v282, %v276
    %v284 = vrot.slane %v283, 4
    %v285 = vadd.f32 %v283, %v284
    %v286 = vrot.slane %v285, 2
    %v287 = vadd.f32 %v285, %v286
    %v288 = vrot.slane %v287, 1
    %v289 = vadd.f32 %v287, %v288
    %s290 = sld [smem:[#allocation2]]
    %v291 = vstv %s290
    %v292 = vadd.f32 %v289, %v291
    %293 = vst [vmem:[#allocation3] sm:$0x1] %v292
    // Predicated region
    $region22: #{tpu_custom_call.1} parent=1 // pred_check
      _
    $region23: #{tpu_custom_call.1} parent=1 // pred_check_branch
      %295 = sbr.rel (0) target = $region25
    $region24: #{tpu_custom_call.1} parent=1 // pred_region
      %s297 = ssub.s32 16, 16
      %298 = vsyncadd [#allocation4], %s297
      %s300 = sshll.u32 [#allocation3], 4
      %s301 = int_to_ptr.vmem [resolvable:$true] %s300
      %303 = dma.vmem_to_hbm [thread:$0]  %s301, 16, %s5, [#allocation4]
    $region25: #{tpu_custom_call.1} parent=1 // pred_fallthru
      _
    // Predicated region
    $region26: #{tpu_custom_call.1} parent=1 // pred_check
      _
    $region27: #{tpu_custom_call.1} parent=1 // pred_check_branch
      %305 = sbr.rel (0) target = $region29
    $region28: #{tpu_custom_call.1} parent=1 // pred_region
      %306 = dma.done [#allocation4], 16
    $region29: #{tpu_custom_call.1} parent=1 // pred_fallthru
      _
    %307 = vsyncpa [#allocation4], 1

</llo_original>
